<compile_context>
chip_gen: v5e
topology: v5e:2x2
jax: 0.10.0
libtpu: 0.0.40
codegen_flags: <defaults>
</compile_context>

<pallas_src>
import functools

import jax
import jax.numpy as jnp
from jax.experimental import pallas as pl
from jax.experimental.pallas import tpu as pltpu


def _round_up(x, m):
    return (x + m - 1) // m * m


def patch_embed_kernel(p_ref, w_ref, b_ref, o_ref):
    # p_ref: (TM, K) compute_dtype patch rows   w_ref: (K, E_pad) projection
    # b_ref: (1, E_pad) f32 bias                o_ref: (TM, E_pad) out_dtype
    acc = jnp.dot(p_ref[...], w_ref[...], preferred_element_type=jnp.float32)
    o_ref[...] = (acc + b_ref[...]).astype(o_ref.dtype)


def _choose_tile_m(M, tile_m, row_bytes, fixed_bytes, budget_bytes):
    """Largest TM <= tile_m whose double-buffered working set fits the budget."""
    tm = min(tile_m, M)
    while tm > 16 and 2 * tm * row_bytes + fixed_bytes > budget_bytes:
        tm //= 2
    if tm < M:
        # bf16 sublane pack is (16, 128): keep the M tile a multiple of 16.
        tm = max(16, (tm // 16) * 16)
    return tm


@functools.partial(
    jax.jit,
    static_argnames=("patch_size", "tile_m", "compute_dtype", "out_dtype"))
def patch_embed(x, weight, bias, patch_size, *,
                tile_m=2048, compute_dtype=jnp.bfloat16, out_dtype=None):
    """x: (B, C, H, W) NCHW.  weight: (E, C, P, P) Conv2d layout.  bias: (E,).

    Returns (B, num_patches, E) in `out_dtype` (defaults to x.dtype, matching
    the PyTorch module; pass jnp.bfloat16 to halve output HBM traffic)."""
    B, C, H, W = x.shape
    E = weight.shape[0]
    P = patch_size
    gh, gw = H // P, W // P
    n_patches = gh * gw
    K = C * P * P
    out_dtype = jnp.dtype(x.dtype if out_dtype is None else out_dtype)
    compute_dtype = jnp.dtype(compute_dtype)

    # Conv2d(stride=P) only sees full windows: crop any remainder (no-op when
    # H, W are exact multiples of P).
    if H != gh * P or W != gw * P:
        x = x[:, :, :gh * P, :gw * P]

    # Patchify on the XLA side: one read of x + one compute_dtype write of
    # (M, K).  Casting first halves the bytes the transpose copy moves.
    # TODO(synk): fuse this rearrange into the kernel (NCHW slab DMA + in-VMEM
    # (c, ph, pw) shuffle); Mosaic cannot currently lower the minor-dim
    # split/transpose that requires, so it stays a single XLA copy.
    xc = x.astype(compute_dtype)
    patches = xc.reshape(B, C, gh, P, gw, P)
    patches = patches.transpose(0, 2, 4, 1, 3, 5)        # (B, gh, gw, C, P, P)
    patches = patches.reshape(B * n_patches, K)           # (M, K)

    w_mat = weight.reshape(E, K).T.astype(compute_dtype)  # (K, E)
    b_mat = bias.reshape(1, E).astype(jnp.float32)         # (1, E)

    # Lane-dense output: pad E to a multiple of 128 (unmasked vst).  Standard
    # ViT widths (768 / 1024 / 1280) need no padding and no post-call slice.
    E_pad = _round_up(E, 128)
    if E_pad != E:
        w_mat = jnp.pad(w_mat, ((0, 0), (0, E_pad - E)))
        b_mat = jnp.pad(b_mat, ((0, 0), (0, E_pad - E)))

    M = B * n_patches
    in_bytes = compute_dtype.itemsize
    out_bytes = out_dtype.itemsize
    row_bytes = K * in_bytes + E_pad * out_bytes
    # Weight + bias (double-buffered by default by the pipeline).
    # TODO(synk): mark the weight/bias BlockSpecs pipeline_mode=pl.Buffered(1)
    # (constant index_maps) once single-buffering is confirmed supported; the
    # second weight buffer is pure wasted VMEM.
    fixed_bytes = 2 * (K * E_pad * in_bytes + E_pad * 4)
    budget_bytes = 24 * 1024 * 1024      # keeps the call inside a 32 MiB scope
    TM = _choose_tile_m(M, tile_m, row_bytes, fixed_bytes, budget_bytes)
    grid_m = pl.cdiv(M, TM)   # ragged last block is masked by Pallas; no jnp.pad

    cost = pl.CostEstimate(
        flops=2 * M * K * E_pad,
        transcendentals=0,
        bytes_accessed=(M * K * in_bytes + K * E_pad * in_bytes
                        + E_pad * 4 + M * E_pad * out_bytes),
    )

    out = pl.pallas_call(
        patch_embed_kernel,
        out_shape=jax.ShapeDtypeStruct((M, E_pad), out_dtype),
        grid_spec=pltpu.PrefetchScalarGridSpec(
            num_scalar_prefetch=0,
            grid=(grid_m,),
            in_specs=[
                pl.BlockSpec((TM, K), lambda i: (i, 0)),      # patch-row tile
                pl.BlockSpec((K, E_pad), lambda i: (0, 0)),   # weight, resident
                pl.BlockSpec((1, E_pad), lambda i: (0, 0)),   # bias, resident
            ],
            out_specs=pl.BlockSpec((TM, E_pad), lambda i: (i, 0)),
        ),
        compiler_params=pltpu.CompilerParams(
            # TODO(synk): on v7x confirm the M axis shards across both
            # TensorCores; if profiling shows one TC idle, switch to
            # pltpu.CORE_PARALLEL or an explicit leading grid axis of size 2.
            dimension_semantics=("parallel",),
            vmem_limit_bytes=32 * 1024 * 1024,
        ),
        cost_estimate=cost,
    )(patches, w_mat, b_mat)

    if E_pad != E:
        out = out[:, :E]
    return out.reshape(B, n_patches, E)


if __name__ == "__main__":
    # Small, module-consistent shapes: img_size=16, patch_size=4,
    # in_chans=4, embed_dim=32 -> num_patches = (16/4)^2 = 16.
    B, C, H, W = 2, 4, 16, 16
    P = 4
    E = 32

    key = jax.random.PRNGKey(0)
    kx, kw, kb = jax.random.split(key, 3)

    x = jax.random.normal(kx, (B, C, H, W), dtype=jnp.float32)
    weight = jax.random.normal(kw, (E, C, P, P), dtype=jnp.float32) * 0.02
    bias = jax.random.normal(kb, (E,), dtype=jnp.float32) * 0.01

    # Default path: output dtype follows x.dtype (PyTorch module semantics).
    out = patch_embed(x, weight, bias, P)
    out = jax.block_until_ready(out)

    # bf16-output variant (halves output writeback on this HBM-bound op).
    out_bf16 = patch_embed(x, weight, bias, P, out_dtype=jnp.bfloat16)
    out_bf16 = jax.block_until_ready(out_bf16)

    gh, gw = H // P, W // P
    K = C * P * P
    ref_patches = x.reshape(B, C, gh, P, gw, P).transpose(0, 2, 4, 1, 3, 5)
    ref_patches = ref_patches.reshape(B, gh * gw, K)

    # Reference matched to the kernel's compute path (bf16 operands, f32 acc).
    ref_bf16 = jnp.einsum(
        "bnk,ek->bne",
        ref_patches.astype(jnp.bfloat16),
        weight.reshape(E, K).astype(jnp.bfloat16),
        preferred_element_type=jnp.float32,
    ) + bias
    # Full-precision module reference (sanity: bf16 error is small here).
    ref_f32 = jnp.einsum("bnk,ek->bne", ref_patches, weight.reshape(E, K)) + bias

    assert out.shape == (B, gh * gw, E)
    assert out.dtype == x.dtype
    assert jnp.allclose(out, ref_bf16, atol=1e-2, rtol=1e-2)
    assert jnp.allclose(out, ref_f32, atol=5e-2, rtol=5e-2)

    assert out_bf16.shape == (B, gh * gw, E)
    assert out_bf16.dtype == jnp.bfloat16
    assert jnp.allclose(out_bf16.astype(jnp.float32), ref_bf16, atol=2e-2, rtol=2e-2)

    print("KERNEL_OK")
</pallas_src>

<mosaic_0001>
module attributes {stable_mosaic.version = 11 : i64} {
  func.func @patch_embed_kernel(%arg0: i32, %arg1: memref<32x64xbf16, #tpu.memory_space<vmem>>, %arg2: memref<64x128xbf16, #tpu.memory_space<vmem>>, %arg3: memref<1x128xf32, #tpu.memory_space<vmem>>, %arg4: memref<32x128xf32, #tpu.memory_space<vmem>>) attributes {dimension_semantics = [#tpu.dimension_semantics<parallel>], iteration_bounds = array<i64: 1>, scalar_prefetch = 0 : i64, scratch_operands = 0 : i64, tpu.core_type = #tpu.core_type<tc>, window_params = [{transform_indices = @transform_0, window_bounds = array<i64: 32, 64>}, {pipeline_mode = #tpu.pipeline_mode<synchronous>, transform_indices = @transform_1, window_bounds = array<i64: 64, 128>}, {pipeline_mode = #tpu.pipeline_mode<synchronous>, transform_indices = @transform_2, window_bounds = array<i64: 1, 128>}, {transform_indices = @transform_3, window_bounds = array<i64: 32, 128>}]} {
    %c0 = arith.constant 0 : index
    %c0_0 = arith.constant 0 : index
    %0 = vector.load %arg1[%c0, %c0_0] : memref<32x64xbf16, #tpu.memory_space<vmem>>, vector<32x64xbf16>
    %c0_1 = arith.constant 0 : index
    %c0_2 = arith.constant 0 : index
    %1 = vector.load %arg2[%c0_1, %c0_2] : memref<64x128xbf16, #tpu.memory_space<vmem>>, vector<64x128xbf16>
    %cst = arith.constant dense<0.000000e+00> : vector<32x128xf32>
    %2 = tpu.matmul %0, %1, %cst {dimension_numbers = #tpu.dot_dimension_numbers<[1], [0], [0], [1], [0, 0, 1, 1], [], []>} : vector<32x64xbf16>, vector<64x128xbf16>, vector<32x128xf32> -> vector<32x128xf32>
    %c0_3 = arith.constant 0 : index
    %c0_4 = arith.constant 0 : index
    %3 = vector.load %arg3[%c0_3, %c0_4] : memref<1x128xf32, #tpu.memory_space<vmem>>, vector<1x128xf32>
    %4 = vector.broadcast %3 : vector<1x128xf32> to vector<32x128xf32>
    %5 = arith.addf %2, %4 : vector<32x128xf32>
    %c0_5 = arith.constant 0 : index
    %c0_6 = arith.constant 0 : index
    %6 = vector.load %arg4[%c0_5, %c0_6] : memref<32x128xf32, #tpu.memory_space<vmem>>, vector<32x128xf32>
    tpu.vector_store %arg4[%c0_5, %c0_6], %5 {strides = array<i32>} : memref<32x128xf32, #tpu.memory_space<vmem>>, vector<32x128xf32>,
    return
  }
  func.func @transform_0(%arg0: i32) -> (i32, i32) {
    %c0_i32 = arith.constant 0 : i32
    %c0_i32_0 = arith.constant 0 : i32
    return %arg0, %c0_i32 : i32, i32
  }
  func.func @transform_1(%arg0: i32) -> (i32, i32) {
    %c0_i32 = arith.constant 0 : i32
    %c0_i32_0 = arith.constant 0 : i32
    %c0_i32_1 = arith.constant 0 : i32
    return %c0_i32, %c0_i32_0 : i32, i32
  }
  func.func @transform_2(%arg0: i32) -> (i32, i32) {
    %c0_i32 = arith.constant 0 : i32
    %c0_i32_0 = arith.constant 0 : i32
    %c0_i32_1 = arith.constant 0 : i32
    return %c0_i32, %c0_i32_0 : i32, i32
  }
  func.func @transform_3(%arg0: i32) -> (i32, i32) {
    %c0_i32 = arith.constant 0 : i32
    %c0_i32_0 = arith.constant 0 : i32
    return %arg0, %c0_i32 : i32, i32
  }
}

</mosaic_0001>

<llo_original>
// kernel: patch_embed.1
$region0: #{patch_embed.1}
  #allocation0 [shape = 'u32[]', space=smem, size = 0x4, offset = 0x4, fixed_abs, tag = 'smem constant byte address 0x4 - core index']
  #allocation1 [shape = 'u32[72,128]{1,0:T(1,128)}', space=vmem, size = 0x9000, scoped, tag = 'internal scratch']
  %s0 = inlined_call_operand.vmem [shape: bf16[32,64], index: 0, kind: input, shape index: {}]
  %s1 = inlined_call_operand.vmem [shape: bf16[64,128], index: 1, kind: input, shape index: {}]
  %s2 = inlined_call_operand.vmem [shape: f32[1,128], index: 2, kind: input, shape index: {}]
  %s3 = inlined_call_operand.hbm [shape: f32[32,128], index: 3, kind: output, shape index: {}]
  %s4 = sld [smem:[#allocation0]]
  $region22: #{patch_embed.1} parent=0
    _
  %s6 = ssub.s32 1, %s4
  %s7 = scalar_select 0, %s6, %s4
  $region1: #{patch_embed.1} parent=0
    #allocation2 [shape = 'u8[16384]{0}', space=vmem, size = 0x4000, scoped, tag = 'output window, operand 0, single buffered']
    #allocation3 [shape = 's32[1]{0}', space=sflag, size = 0x4, scoped, tag = 'scoped memory for patch_embed.1']
    %8 = vsyncpa [#allocation3], 0
    // Predicated region
    $region2: #{patch_embed.1} parent=1 // pred_check
      _
    $region3: #{patch_embed.1} parent=1 // pred_check_branch
      %10 = sbr.rel (0) target = $region5
    $region4: #{patch_embed.1} parent=1 // pred_region
      _
    $region5: #{patch_embed.1} parent=1 // pred_fallthru
      _
    // Predicated region
    $region6: #{patch_embed.1} parent=1 // pred_check
      _
    $region7: #{patch_embed.1} parent=1 // pred_check_branch
      %12 = sbr.rel (0) target = $region9
    $region8: #{patch_embed.1} parent=1 // pred_region
      _
    $region9: #{patch_embed.1} parent=1 // pred_fallthru
      _
    // Predicated region
    $region10: #{patch_embed.1} parent=1 // pred_check
      _
    $region11: #{patch_embed.1} parent=1 // pred_check_branch
      %14 = sbr.rel (0) target = $region13
    $region12: #{patch_embed.1} parent=1 // pred_region
      _
    $region13: #{patch_embed.1} parent=1 // pred_fallthru
      _
    %v16 = vld [vmem:[%s0] sm:$0xf]
    %v17 = vld [vmem:[%s0 + $0x4] sm:$0xf]
    %v18 = vld [vmem:[%s0 + $0x8] sm:$0xf]
    %v19 = vld [vmem:[%s0 + $0xc] sm:$0xf]
    %v20 = vld [vmem:[%s1] sm:$0xf]
    %v21 = vld [vmem:[%s1 + $0x4] sm:$0xf]
    %v22 = vld [vmem:[%s1 + $0x8] sm:$0xf]
    %v23 = vld [vmem:[%s1 + $0xc] sm:$0xf]
    %v24 = vld [vmem:[%s1 + $0x10] sm:$0xf]
    %v25 = vld [vmem:[%s1 + $0x14] sm:$0xf]
    %v26 = vld [vmem:[%s1 + $0x18] sm:$0xf]
    %v27 = vld [vmem:[%s1 + $0x1c] sm:$0xf]
    %v28 = vld [vmem:[%s2] sm:$0x1]
    %v30 = vperm.slane %v28, 0
    %v36 = vunpack.c.l.b16 %v16
    %v37 = vunpack.c.l.b16 %v17
    %v38 = vunpack.c.l.b16 %v18
    %v39 = vunpack.c.l.b16 %v19
    %v40 = vpack.c.b16 %v37, %v36
    %v41 = vpack.c.b16 %v39, %v38
    %v50 = vunpack.c.l.b16 %v20
    %v51 = vunpack.c.l.b16 %v21
    %v52 = vunpack.c.l.b16 %v22
    %v53 = vunpack.c.l.b16 %v23
    %v54 = vunpack.c.l.b16 %v24
    %v55 = vunpack.c.l.b16 %v25
    %v56 = vunpack.c.l.b16 %v26
    %v57 = vunpack.c.l.b16 %v27
    %v58 = vpack.c.b16 %v51, %v50
    %v59 = vpack.c.b16 %v53, %v52
    %v60 = vpack.c.b16 %v55, %v54
    %v61 = vpack.c.b16 %v57, %v56
    %vm66 = vcmask 523264
    %v68 = vsel %vm66, %v40, 0
    %v71 = vsel %vm66, %v41, 0
    %73 = vmatpush.bf16.msra.mxu0 0
    %74 = vmatpush.bf16.msra.mxu0 0
    %75 = vmatpush.bf16.msra.mxu0 0
    %76 = vmatpush.bf16.msra.mxu0 0
    %77 = vmatpush.bf16.msra.mxu0 %v61
    %78 = vmatpush.bf16.msra.mxu0 %v60
    %79 = vmatpush.bf16.msra.mxu0 %v59
    %80 = vmatpush.bf16.msra.mxu0 %v58
    %81 = vmatmul.bf16.gmra.mxu0 %v68
    %v82 = vpop.f32.mrf.mxu0
    %v83 = vadd.f32 %v30, %v82
    %v84 = vpop.f32.mrf.mxu0
    %v85 = vadd.f32 %v30, %v84
    %86 = vmatmul.bf16.gmra.mxu0 %v71
    %v87 = vpop.f32.mrf.mxu0
    %v88 = vadd.f32 %v30, %v87
    %v89 = vpop.f32.mrf.mxu0
    %v90 = vadd.f32 %v30, %v89
    %91 = vdwg.mxu0
    %92 = vst [vmem:[#allocation2] sm:$0xff] %v83
    %93 = vst [vmem:[#allocation2 + $0x8] sm:$0xff] %v85
    %94 = vst [vmem:[#allocation2 + $0x10] sm:$0xff] %v88
    %95 = vst [vmem:[#allocation2 + $0x18] sm:$0xff] %v90
    // Predicated region
    $region14: #{patch_embed.1} parent=1 // pred_check
      _
    $region15: #{patch_embed.1} parent=1 // pred_check_branch
      %97 = sbr.rel (0) target = $region17
    $region16: #{patch_embed.1} parent=1 // pred_region
      %99 = vsyncadd [#allocation3], 0
      %s100 = sshll.u32 [#allocation2], 4
      %s101 = int_to_ptr.vmem [resolvable:$true] %s100
      %s102 = sshll.u32 %s3, 4
      %s103 = int_to_ptr.hbm [resolvable:$true] %s102
      %108 = dma.vmem_to_hbm [thread:$0]  %s101, 512, %s103, [#allocation3], 128, 128, 8
    $region17: #{patch_embed.1} parent=1 // pred_fallthru
      _
    // Predicated region
    $region18: #{patch_embed.1} parent=1 // pred_check
      _
    $region19: #{patch_embed.1} parent=1 // pred_check_branch
      %110 = sbr.rel (0) target = $region21
    $region20: #{patch_embed.1} parent=1 // pred_region
      %112 = dma.done [#allocation3], 512
    $region21: #{patch_embed.1} parent=1 // pred_fallthru
      _
    %113 = vsyncpa [#allocation3], 1

</llo_original>
